<compile_context>
chip_gen: v7x
topology: tpu7x:2x2x1
jax: 0.10.0
libtpu: 0.0.40
codegen_flags: <defaults>
</compile_context>

<pallas_src>
import functools

import jax
import jax.numpy as jnp
from jax.experimental import pallas as pl
from jax.experimental.pallas import tpu as pltpu


def _static_pow(base, gamma):
    """base ** gamma for a *static* gamma; integer gammas use only VPU multiplies."""
    g = float(gamma)
    if g == 0.0:
        return jnp.ones_like(base)
    if g.is_integer() and g > 0:
        p = int(g)
        result = None
        while p:
            if p & 1:
                result = base if result is None else result * base
            p >>= 1
            if p:
                base = base * base
        return result
    return jnp.power(base, g)  # static scalar exponent fallback (non-integer gamma)


def _asl_kernel(x_ref, y_ref, o_ref, *, gamma_neg, gamma_pos, clip, eps,
                block_rows, n, m_total, needs_mask):
    x = x_ref[...].astype(jnp.float32)
    y = y_ref[...].astype(jnp.float32)
    is_pos = y > 0.5  # y is a binarized multi-label target

    xs_pos = jax.nn.sigmoid(x)
    xs_neg = 1.0 - xs_pos
    if clip is not None and clip > 0:
        xs_neg_c = jnp.minimum(xs_neg + clip, 1.0)
    else:
        xs_neg_c = xs_neg

    # loss = y*log(clamp(xs_pos)) + (1-y)*log(clamp(xs_neg_c)); y binary -> one log.
    p_sel = jnp.where(is_pos, xs_pos, xs_neg_c)
    loss = jnp.log(jnp.maximum(p_sel, eps))

    if gamma_neg > 0 or gamma_pos > 0:
        # (1 - pt) ** (gamma_pos*y + gamma_neg*(1-y)) with binary y, static gammas:
        #   y=1: (1 - xs_pos) ** gamma_pos     y=0: (1 - xs_neg_clipped) ** gamma_neg
        w_pos = _static_pow(xs_neg, gamma_pos)
        w_neg = _static_pow(1.0 - xs_neg_c, gamma_neg)
        loss = loss * jnp.where(is_pos, w_pos, w_neg)

    if needs_mask:  # static python bool: only emitted for ragged batch sizes
        row = (jax.lax.broadcasted_iota(jnp.int32, (block_rows, n), 0)
               + pl.program_id(0) * block_rows)
        loss = jnp.where(row < m_total, loss, 0.0)

    # Fold the tile into an (8, n) partial sum using pure elementwise VPU adds.
    o_ref[0] = loss.reshape(block_rows // 8, 8, n).sum(axis=0)


def _choose_block_rows(m, n, target_bytes=2 << 20):
    """Largest multiple-of-8 row tile with ~target_bytes per f32 input block."""
    rows = max(8, (target_bytes // (4 * max(n, 1))) // 8 * 8)
    rows_cap = ((m + 7) // 8) * 8
    return int(min(rows, rows_cap))


def asymmetric_loss(x, y, *, gamma_neg=4, gamma_pos=1, clip=0.05, eps=1e-8,
                    block_rows=None):
    """Pallas implementation of AsymmetricLossOptimized.forward (weight=None).

    x: [batch, num_labels] logits (float).  y: [batch, num_labels] binarized
    targets (float / int8 / bool all accepted; cast to f32 in-kernel).
    """
    assert x.shape == y.shape and x.ndim == 2
    m, n = x.shape
    if block_rows is None:
        block_rows = _choose_block_rows(m, n)
    assert block_rows >= 8 and block_rows % 8 == 0
    num_blocks = (m + block_rows - 1) // block_rows
    needs_mask = (m % block_rows) != 0

    kernel = functools.partial(
        _asl_kernel, gamma_neg=gamma_neg, gamma_pos=gamma_pos, clip=clip,
        eps=eps, block_rows=block_rows, n=n, m_total=m, needs_mask=needs_mask)

    partials = pl.pallas_call(
        kernel,
        out_shape=jax.ShapeDtypeStruct((num_blocks, 8, n), jnp.float32),
        grid_spec=pltpu.PrefetchScalarGridSpec(
            num_scalar_prefetch=0,
            grid=(num_blocks,),
            in_specs=[
                pl.BlockSpec((block_rows, n), lambda i: (i, 0)),
                pl.BlockSpec((block_rows, n), lambda i: (i, 0)),
            ],
            out_specs=pl.BlockSpec((1, 8, n), lambda i: (i, 0, 0)),
        ),
        compiler_params=pltpu.CompilerParams(
            dimension_semantics=("parallel",)),  # per-block partials -> 2-TC on v7x
    )(x, y)
    # Tiny (num_blocks x 8 x n) final reduction + sign flip outside the kernel.
    return -jnp.sum(partials)


def asymmetric_loss_ref(x, y, *, gamma_neg=4, gamma_pos=1, clip=0.05, eps=1e-8):
    """Pure-JAX reference mirroring the PyTorch forward."""
    x = x.astype(jnp.float32)
    y = y.astype(jnp.float32)
    anti = 1.0 - y
    xs_pos = jax.nn.sigmoid(x)
    xs_neg = 1.0 - xs_pos
    if clip is not None and clip > 0:
        xs_neg = jnp.minimum(xs_neg + clip, 1.0)
    loss = y * jnp.log(jnp.maximum(xs_pos, eps))
    loss = loss + anti * jnp.log(jnp.maximum(xs_neg, eps))
    if gamma_neg > 0 or gamma_pos > 0:
        pt = xs_pos * y + xs_neg * anti
        loss = loss * jnp.power(1.0 - pt, gamma_pos * y + gamma_neg * anti)
    return -jnp.sum(loss)


if __name__ == "__main__":
    key = jax.random.PRNGKey(0)
    kx, ky = jax.random.split(key)

    batch, num_labels = 16, 128
    x = jax.random.normal(kx, (batch, num_labels), dtype=jnp.float32)
    y = (jax.random.uniform(ky, (batch, num_labels)) > 0.7).astype(jnp.float32)

    out = jax.block_until_ready(asymmetric_loss(x, y))
    ref = asymmetric_loss_ref(x, y)
    assert jnp.allclose(out, ref, rtol=1e-4, atol=1e-3), (out, ref)

    # int8 targets (lower HBM traffic for y) — identical result.
    out_i8 = jax.block_until_ready(asymmetric_loss(x, y.astype(jnp.int8)))
    assert jnp.allclose(out_i8, ref, rtol=1e-4, atol=1e-3), (out_i8, ref)

    # Ragged batch: tail block masked in-kernel (no divisibility requirement).
    kx2, ky2 = jax.random.split(jax.random.PRNGKey(1))
    x2 = jax.random.normal(kx2, (24, num_labels), dtype=jnp.float32)
    y2 = (jax.random.uniform(ky2, (24, num_labels)) > 0.7).astype(jnp.float32)
    out2 = jax.block_until_ready(asymmetric_loss(x2, y2, block_rows=16))
    ref2 = asymmetric_loss_ref(x2, y2)
    assert jnp.allclose(out2, ref2, rtol=1e-4, atol=1e-3), (out2, ref2)

    # TODO(synk): optional `weight` multiplier of the PyTorch forward is not wired in
    # (module is exercised with weight=None); add a third input block if ever needed.
    print("KERNEL_OK")
</pallas_src>

<mosaic_0001>
module attributes {stable_mosaic.version = 11 : i64} {
  func.func @_asl_kernel(%arg0: i32, %arg1: memref<16x128xf32, #tpu.memory_space<vmem>>, %arg2: memref<16x128xf32, #tpu.memory_space<vmem>>, %arg3: memref<1x8x128xf32, #tpu.memory_space<vmem>>) attributes {dimension_semantics = [#tpu.dimension_semantics<parallel>], iteration_bounds = array<i64: 1>, scalar_prefetch = 0 : i64, scratch_operands = 0 : i64, tpu.core_type = #tpu.core_type<tc>, window_params = [{transform_indices = @transform_0, window_bounds = array<i64: 16, 128>}, {transform_indices = @transform_1, window_bounds = array<i64: 16, 128>}, {transform_indices = @transform_2, window_bounds = array<i64: 1, 8, 128>}]} {
    %c0 = arith.constant 0 : index
    %c0_0 = arith.constant 0 : index
    %0 = vector.load %arg1[%c0, %c0_0] : memref<16x128xf32, #tpu.memory_space<vmem>>, vector<16x128xf32>
    %c0_1 = arith.constant 0 : index
    %c0_2 = arith.constant 0 : index
    %1 = vector.load %arg2[%c0_1, %c0_2] : memref<16x128xf32, #tpu.memory_space<vmem>>, vector<16x128xf32>
    %cst = arith.constant 5.000000e-01 : f32
    %2 = vector.broadcast %cst : f32 to vector<16x128xf32>
    %3 = arith.cmpf ogt, %1, %2 : vector<16x128xf32>
    %4 = arith.negf %0 : vector<16x128xf32>
    %5 = math.exp %4 : vector<16x128xf32>
    %cst_3 = arith.constant 1.000000e+00 : f32
    %6 = vector.broadcast %cst_3 : f32 to vector<16x128xf32>
    %7 = arith.addf %6, %5 : vector<16x128xf32>
    %8 = arith.divf %6, %7 : vector<16x128xf32>
    %cst_4 = arith.constant 1.000000e+00 : f32
    %9 = vector.broadcast %cst_4 : f32 to vector<16x128xf32>
    %10 = arith.subf %9, %8 : vector<16x128xf32>
    %cst_5 = arith.constant 5.000000e-02 : f32
    %11 = vector.broadcast %cst_5 : f32 to vector<16x128xf32>
    %12 = arith.addf %10, %11 : vector<16x128xf32>
    %cst_6 = arith.constant 1.000000e+00 : f32
    %13 = vector.broadcast %cst_6 : f32 to vector<16x128xf32>
    %14 = arith.minimumf %12, %13 : vector<16x128xf32>
    %15 = arith.select %3, %8, %14 : vector<16x128xi1>, vector<16x128xf32>
    %cst_7 = arith.constant 9.99999993E-9 : f32
    %16 = vector.broadcast %cst_7 : f32 to vector<16x128xf32>
    %17 = arith.maximumf %15, %16 : vector<16x128xf32>
    %18 = math.log %17 : vector<16x128xf32>
    %cst_8 = arith.constant 1.000000e+00 : f32
    %19 = vector.broadcast %cst_8 : f32 to vector<16x128xf32>
    %20 = arith.subf %19, %14 : vector<16x128xf32>
    %21 = arith.mulf %20, %20 : vector<16x128xf32>
    %22 = arith.mulf %21, %21 : vector<16x128xf32>
    %23 = arith.select %3, %10, %22 : vector<16x128xi1>, vector<16x128xf32>
    %24 = arith.mulf %18, %23 : vector<16x128xf32>
    %25 = vector.shape_cast %24 : vector<16x128xf32> to vector<2x8x128xf32>
    %cst_9 = arith.constant dense<0.000000e+00> : vector<8x128xf32>
    %26 = vector.multi_reduction <add>, %25, %cst_9 [0] : vector<2x8x128xf32> to vector<8x128xf32>
    %c0_10 = arith.constant 0 : index
    %c0_11 = arith.constant 0 : index
    %c0_12 = arith.constant 0 : index
    %27 = vector.load %arg3[%c0_10, %c0_11, %c0_12] : memref<1x8x128xf32, #tpu.memory_space<vmem>>, vector<1x8x128xf32>
    %28 = vector.shape_cast %27 : vector<1x8x128xf32> to vector<8x128xf32>
    %29 = vector.shape_cast %26 : vector<8x128xf32> to vector<1x8x128xf32>
    tpu.vector_store %arg3[%c0_10, %c0_11, %c0_12], %29 {strides = array<i32>} : memref<1x8x128xf32, #tpu.memory_space<vmem>>, vector<1x8x128xf32>,
    return
  }
  func.func @transform_0(%arg0: i32) -> (i32, i32) {
    %c0_i32 = arith.constant 0 : i32
    %c0_i32_0 = arith.constant 0 : i32
    return %arg0, %c0_i32 : i32, i32
  }
  func.func @transform_1(%arg0: i32) -> (i32, i32) {
    %c0_i32 = arith.constant 0 : i32
    %c0_i32_0 = arith.constant 0 : i32
    return %arg0, %c0_i32 : i32, i32
  }
  func.func @transform_2(%arg0: i32) -> (i32, i32, i32) {
    %c0_i32 = arith.constant 0 : i32
    %c0_i32_0 = arith.constant 0 : i32
    %c0_i32_1 = arith.constant 0 : i32
    return %arg0, %c0_i32, %c0_i32_0 : i32, i32, i32
  }
}

</mosaic_0001>

<llo_original>
// kernel: tpu_custom_call.1
$region0: #{tpu_custom_call.1}
  #allocation0 [shape = 'u32[]', space=smem, size = 0x4, offset = 0x4, fixed_abs, tag = 'smem constant byte address 0x4 - core index']
  #allocation1 [shape = 'u32[144,128]{1,0:T(1,128)}', space=vmem, size = 0x12000, scoped, tag = 'internal scratch']
  %s0 = inlined_call_operand.hbm [shape: f32[16,128], index: 0, kind: input, shape index: {}]
  %s1 = inlined_call_operand.hbm [shape: f32[16,128], index: 1, kind: input, shape index: {}]
  %s2 = inlined_call_operand.hbm [shape: f32[1,8,128], index: 2, kind: output, shape index: {}]
  %s3 = sld [smem:[#allocation0]]
  $region26: #{tpu_custom_call.1} parent=0
    _
  %s5 = ssub.s32 1, %s3
  %s6 = scalar_select 0, %s5, %s3
  $region1: #{tpu_custom_call.1} parent=0
    #allocation2 [shape = 'u8[8192]{0}', space=vmem, size = 0x2000, scoped, tag = 'input window, operand 0, single buffered']
    #allocation3 [shape = 's32[1]{0}', space=sflag, size = 0x4, scoped, tag = 'scoped memory for tpu_custom_call.1']
    #allocation4 [shape = 's32[1]{0}', space=sflag, size = 0x4, scoped, tag = 'scoped memory for tpu_custom_call.1']
    #allocation5 [shape = 'u8[8192]{0}', space=vmem, size = 0x2000, scoped, tag = 'input window, operand 1, single buffered']
    #allocation6 [shape = 's32[1]{0}', space=sflag, size = 0x4, scoped, tag = 'scoped memory for tpu_custom_call.1']
    #allocation7 [shape = 'u8[4096]{0}', space=vmem, size = 0x1000, scoped, tag = 'output window, operand 0, single buffered']
    %7 = vsyncpa [#allocation3], 0
    %8 = vsyncpa [#allocation6], 0
    %9 = vsyncpa [#allocation4], 0
    // Predicated region
    $region2: #{tpu_custom_call.1} parent=1 // pred_check
      _
    $region3: #{tpu_custom_call.1} parent=1 // pred_check_branch
      %11 = sbr.rel (0) target = $region5
    $region4: #{tpu_custom_call.1} parent=1 // pred_region
      %s13 = ssub.s32 256, 256
      %14 = vsyncadd [#allocation3], %s13
      %s15 = sshll.u32 [#allocation2], 4
      %s16 = int_to_ptr.vmem [resolvable:$true] %s15
      %21 = dma.hbm_to_vmem [thread:$0]  %s0, 256, %s16, [#allocation3], 128, 128, 8
    $region5: #{tpu_custom_call.1} parent=1 // pred_fallthru
      _
    // Predicated region
    $region6: #{tpu_custom_call.1} parent=1 // pred_check
      _
    $region7: #{tpu_custom_call.1} parent=1 // pred_check_branch
      %23 = sbr.rel (0) target = $region9
    $region8: #{tpu_custom_call.1} parent=1 // pred_region
      %s25 = ssub.s32 256, 256
      %26 = vsyncadd [#allocation6], %s25
      %s27 = sshll.u32 [#allocation5], 4
      %s28 = int_to_ptr.vmem [resolvable:$true] %s27
      %33 = dma.hbm_to_vmem [thread:$0]  %s1, 256, %s28, [#allocation6], 128, 128, 8
    $region9: #{tpu_custom_call.1} parent=1 // pred_fallthru
      _
    // Predicated region
    $region10: #{tpu_custom_call.1} parent=1 // pred_check
      _
    $region11: #{tpu_custom_call.1} parent=1 // pred_check_branch
      %35 = sbr.rel (0) target = $region13
    $region12: #{tpu_custom_call.1} parent=1 // pred_region
      %36 = dma.done [#allocation3], 256
    $region13: #{tpu_custom_call.1} parent=1 // pred_fallthru
      _
    // Predicated region
    $region14: #{tpu_custom_call.1} parent=1 // pred_check
      _
    $region15: #{tpu_custom_call.1} parent=1 // pred_check_branch
      %38 = sbr.rel (0) target = $region17
    $region16: #{tpu_custom_call.1} parent=1 // pred_region
      %39 = dma.done [#allocation6], 256
    $region17: #{tpu_custom_call.1} parent=1 // pred_fallthru
      _
    %v40 = vld [vmem:[#allocation2] sm:$0xff]
    %v41 = vld [vmem:[#allocation2 + $0x8] sm:$0xff]
    %v42 = vld [vmem:[#allocation5] sm:$0xff]
    %v43 = vld [vmem:[#allocation5 + $0x8] sm:$0xff]
    %vm44 = vcmp.gt.f32.partialorder %v42, 0.5
    %vm45 = vcmp.gt.f32.partialorder %v43, 0.5
    %v46 = vxor.u32 %v40, 2147483648
    %v47 = vxor.u32 %v41, 2147483648
    %v48 = vmul.f32 %v46, 1.442695
    %v49 = vpow.pop %v48
    %v50 = vmul.f32 %v47, 1.442695
    %v51 = vpow.pop %v50
    %v52 = vadd.f32 %v49, 1.0
    %v53 = vadd.f32 %v51, 1.0
    %v54 = vrcp.pop %v52
    %v55 = vmul.f32 1.0, %v54
    %v56 = vrcp.pop %v53
    %v57 = vmul.f32 1.0, %v56
    %v58 = vsub.f32 1.0, %v55
    %v59 = vsub.f32 1.0, %v57
    %v60 = vadd.f32 %v58, 0.05
    %v61 = vadd.f32 %v59, 0.05
    %v62 = vmin.f32 %v60, 1.0
    %v63 = vmin.f32 %v61, 1.0
    %v64 = vsel %vm44, %v55, %v62
    %v65 = vsel %vm45, %v57, %v63
    %v66 = vmax.f32 %v64, 1e-08
    %v67 = vmax.f32 %v65, 1e-08
    %v68 = vlog2.pop %v66
    %v69 = vmul.f32 %v68, 0.6931472
    %v70 = vlog2.pop %v67
    %v71 = vmul.f32 %v70, 0.6931472
    %v72 = vsub.f32 1.0, %v62
    %v73 = vsub.f32 1.0, %v63
    %v74 = vmul.f32 %v72, %v72
    %v75 = vmul.f32 %v73, %v73
    %v76 = vmul.f32 %v74, %v74
    %v77 = vmul.f32 %v75, %v75
    %v78 = vsel %vm44, %v58, %v76
    %v79 = vsel %vm45, %v59, %v77
    %v80 = vmul.f32 %v69, %v78
    %v81 = vmul.f32 %v71, %v79
    %v82 = vadd.f32 %v80, %v81
    %83 = vst [vmem:[#allocation7] sm:$0xff] %v82
    // Predicated region
    $region18: #{tpu_custom_call.1} parent=1 // pred_check
      _
    $region19: #{tpu_custom_call.1} parent=1 // pred_check_branch
      %85 = sbr.rel (0) target = $region21
    $region20: #{tpu_custom_call.1} parent=1 // pred_region
      %s87 = ssub.s32 128, 128
      %88 = vsyncadd [#allocation4], %s87
      %s90 = sshll.u32 [#allocation7], 4
      %s91 = int_to_ptr.vmem [resolvable:$true] %s90
      %93 = dma.vmem_to_hbm [thread:$0]  %s91, 128, %s2, [#allocation4]
    $region21: #{tpu_custom_call.1} parent=1 // pred_fallthru
      _
    // Predicated region
    $region22: #{tpu_custom_call.1} parent=1 // pred_check
      _
    $region23: #{tpu_custom_call.1} parent=1 // pred_check_branch
      %95 = sbr.rel (0) target = $region25
    $region24: #{tpu_custom_call.1} parent=1 // pred_region
      %96 = dma.done [#allocation4], 128
    $region25: #{tpu_custom_call.1} parent=1 // pred_fallthru
      _
    %97 = vsyncpa [#allocation3], 1
    %98 = vsyncpa [#allocation6], 1
    %99 = vsyncpa [#allocation4], 1

</llo_original>
